<compile_context>
chip_gen: v6e
topology: v6e:2x2x1
jax: 0.10.0
libtpu: 0.0.40
codegen_flags: <defaults>
</compile_context>

<pallas_src>
import jax
import jax.numpy as jnp
from jax.experimental import pallas as pl
from jax.experimental.pallas import tpu as pltpu

# ---------------- model hyperparameters (small, consistent with the module) ----------------
VOCAB = 32          # target_vocab_size
EMB = 32            # embedding_dim
HID = 32            # hidden_dim
NUM_LAYERS = 1      # num_layers (dropout inactive for 1 layer)
BATCH = 2
SEQ = 8             # encoder sequence length the attention spans

# ---------------- packed weight-slab layout (rows; lane width = 128) ----------------
ROW_WH   = 0                        # [W2^T | Whh^T]              (H, H+3H) = (32, 128)
ROW_W1   = ROW_WH + HID             # W1^T                        (H, H)    = (32, 32)
ROW_WIH  = ROW_W1 + HID             # W_ih^T   ([emb | ctx] in)   (E+H, 3H) = (64, 96)
ROW_WOUT = ROW_WIH + EMB + HID      # W_out^T  ([h | ctx] in)     (2H, V)   = (64, 32)
ROW_BIAS = ROW_WOUT + 2 * HID       # bias tile, one bias per row:
#   ROW_BIAS + 0 : [b1 + b2 | b_hh]   (1, 128)
#   ROW_BIAS + 1 : b_ih               (1, 96)
#   ROW_BIAS + 2 : b_out              (1, 32)
#   ROW_BIAS + 3 : v                  (1, 32)
SLAB_ROWS = ROW_BIAS + 8            # 200 rows (multiple of 8 sublanes)
SLAB_COLS = 128

OUT_COLS = 128                      # output slab: [logits (V) | h_new (H) | attn (T) | pad]


def decoder_step_kernel(emb_ref, h_ref, enc3_ref, enc2_ref, w_ref, out_ref):
    """Fused single decoder step: additive attention -> GRU cell -> output projection."""
    H, V, T, E = HID, VOCAB, SEQ, EMB
    x_e = emb_ref[...]                          # (B, E)     embedded input token
    h = h_ref[...]                              # (B, H)     top-layer decoder hidden
    enc3 = enc3_ref[...]                        # (B, T, H)  encoder outputs
    enc2 = enc2_ref[...]                        # (B*T, H)   same data, wrapper-flattened
    B = x_e.shape[0]

    # -------- static views into the single packed weight slab (one DMA at entry) --------
    w_h_all = w_ref[ROW_WH:ROW_WH + H, :]                     # (32, 128)  [W2^T | Whh^T]
    w1t     = w_ref[ROW_W1:ROW_W1 + H, :H]                    # (32, 32)
    w_ih    = w_ref[ROW_WIH:ROW_WIH + E + H, :3 * H]          # (64, 96)
    w_out   = w_ref[ROW_WOUT:ROW_WOUT + 2 * H, :V]            # (64, 32)
    b_h_all = w_ref[ROW_BIAS + 0:ROW_BIAS + 1, :]             # (1, 128)   [b1+b2 | b_hh]
    b_ih    = w_ref[ROW_BIAS + 1:ROW_BIAS + 2, :3 * H]        # (1, 96)
    b_out   = w_ref[ROW_BIAS + 2:ROW_BIAS + 3, :V]            # (1, 32)
    v_row   = w_ref[ROW_BIAS + 3:ROW_BIAS + 4, :H]            # (1, 32)

    # -------- fused hidden-state projection: [a2 | gh] in ONE full-128-lane MXU push --------
    h_all = jnp.dot(h, w_h_all, preferred_element_type=jnp.float32) + b_h_all   # (B, 128)
    a2 = h_all[:, :H]            # (B, H)   W2 h + b1 + b2
    gh = h_all[:, H:]            # (B, 3H)  Whh h + b_hh

    # -------- additive attention --------
    a1 = jnp.dot(enc2, w1t, preferred_element_type=jnp.float32)      # (B*T, H) one MXU push
    a1 = a1.reshape(B, T, H)     # lone in-kernel relayout (2 KB); enc was flattened in wrapper
    e = jnp.tanh(a1 + a2[:, None, :])                                # (B, T, H)
    scores = jnp.sum(e * v_row, axis=-1)                             # (B, T)   XLU reduce
    m = jnp.max(scores, axis=1, keepdims=True)
    p = jnp.exp(scores - m)
    attn = p / jnp.sum(p, axis=1, keepdims=True)                     # (B, T)
    context = jnp.sum(attn[:, :, None] * enc3, axis=1)               # (B, H)   kept off the MXU

    # -------- GRU cell (PyTorch gate order r, z, n); one matmul on the lane-concat input --------
    xc = jnp.concatenate([x_e, context], axis=1)                     # (B, E+H) = (B, 64)
    gi = jnp.dot(xc, w_ih, preferred_element_type=jnp.float32) + b_ih   # (B, 3H)
    r = jax.nn.sigmoid(gi[:, 0:H] + gh[:, 0:H])
    z = jax.nn.sigmoid(gi[:, H:2 * H] + gh[:, H:2 * H])
    n = jnp.tanh(gi[:, 2 * H:3 * H] + r * gh[:, 2 * H:3 * H])
    h_new = (1.0 - z) * n + z * h                                    # (B, H)

    # -------- output layer on [h_new | context]; one matmul --------
    hc = jnp.concatenate([h_new, context], axis=1)                   # (B, 2H) = (B, 64)
    logits = jnp.dot(hc, w_out, preferred_element_type=jnp.float32) + b_out   # (B, V)

    # -------- single lane-concatenated (B, 128) output slab: one store, one writeback --------
    pad = jnp.zeros((B, OUT_COLS - (V + H + T)), jnp.float32)
    out_ref[...] = jnp.concatenate([logits, h_new, attn, pad], axis=1)


def decoder_forward(input_token, hidden, encoder_outputs, packed_params):
    """input_token: (B, 1) int32; hidden: (NUM_LAYERS, B, H); encoder_outputs: (B, T, H).
    Returns (logits (B, V), new_hidden (NUM_LAYERS, B, H), attn_weights (B, T))."""
    emb, w_slab = packed_params
    B, T, H = encoder_outputs.shape
    V = emb.shape[0]

    # Embedding lookup (gather) — JAX glue; negligible at this vocab size.
    embedded = jnp.take(emb, input_token[:, 0], axis=0)              # (B, E)
    dec_hidden = hidden[-1]                                          # (B, H)
    enc2 = encoder_outputs.reshape(B * T, H)                         # free layout plumbing

    vmem = pl.BlockSpec(memory_space=pltpu.MemorySpace.VMEM)
    out_slab = pl.pallas_call(
        decoder_step_kernel,
        out_shape=jax.ShapeDtypeStruct((B, OUT_COLS), jnp.float32),
        in_specs=[vmem] * 5,
        out_specs=vmem,
    )(embedded, dec_hidden, encoder_outputs, enc2, w_slab)

    logits = out_slab[:, :V]
    h_new = out_slab[:, V:V + H]
    attn = out_slab[:, V + H:V + H + T]
    return logits, h_new[None], attn                                 # NUM_LAYERS == 1


def init_params(key):
    """Raw weights, pre-transposed for x @ W.
    When importing a real PyTorch checkpoint: weight_ih_l0 is (3H, E+H) with row blocks in
    (r, z, n) order and columns split [embedded | context]; transpose it to obtain wih_t,
    and transpose output_layer.weight (V, 2H) with columns [output | context] to get wout_t."""
    ks = jax.random.split(key, 12)
    scale = 1.0 / jnp.sqrt(HID)

    def u(k, shape):
        return jax.random.uniform(k, shape, jnp.float32, -scale, scale)

    emb = jax.random.normal(ks[0], (VOCAB, EMB), jnp.float32)
    w1t = u(ks[1], (HID, HID)); b1 = u(ks[2], (HID,))
    w2t = u(ks[3], (HID, HID)); b2 = u(ks[4], (HID,))
    v_row = u(ks[5], (HID,))
    wih_t = u(ks[6], (EMB + HID, 3 * HID))
    whh_t = u(ks[7], (HID, 3 * HID))
    b_ih = u(ks[8], (3 * HID,))
    b_hh = u(ks[9], (3 * HID,))
    wout_t = u(ks[10], (2 * HID, VOCAB))
    b_out = u(ks[11], (VOCAB,))
    return (emb, w1t, b1, w2t, b2, v_row, wih_t, whh_t, b_ih, b_hh, wout_t, b_out)


def pack_params(raw):
    """Pack every non-embedding weight/bias into ONE (200, 128) f32 slab (single VMEM DMA)."""
    (emb, w1t, b1, w2t, b2, v_row, wih_t, whh_t, b_ih, b_hh, wout_t, b_out) = raw
    slab = jnp.zeros((SLAB_ROWS, SLAB_COLS), jnp.float32)
    slab = slab.at[ROW_WH:ROW_WH + HID, 0:HID].set(w2t)                       # [W2^T | Whh^T]
    slab = slab.at[ROW_WH:ROW_WH + HID, HID:HID + 3 * HID].set(whh_t)
    slab = slab.at[ROW_W1:ROW_W1 + HID, 0:HID].set(w1t)
    slab = slab.at[ROW_WIH:ROW_WIH + EMB + HID, 0:3 * HID].set(wih_t)
    slab = slab.at[ROW_WOUT:ROW_WOUT + 2 * HID, 0:VOCAB].set(wout_t)
    slab = slab.at[ROW_BIAS + 0, 0:HID].set(b1 + b2)                          # fold attention biases
    slab = slab.at[ROW_BIAS + 0, HID:HID + 3 * HID].set(b_hh)
    slab = slab.at[ROW_BIAS + 1, 0:3 * HID].set(b_ih)
    slab = slab.at[ROW_BIAS + 2, 0:VOCAB].set(b_out)
    slab = slab.at[ROW_BIAS + 3, 0:HID].set(v_row)
    return emb, slab


def decoder_reference(input_token, hidden, encoder_outputs, raw):
    """Pure-JAX reference of the same Decoder forward, using the raw (unpacked) weights."""
    (emb, w1t, b1, w2t, b2, v_row, wih_t, whh_t, b_ih, b_hh, wout_t, b_out) = raw
    H = HID
    embedded = jnp.take(emb, input_token[:, 0], axis=0)              # (B, E)
    h = hidden[-1]                                                   # (B, H)

    a1 = jnp.einsum('bth,hk->btk', encoder_outputs, w1t) + b1
    a2 = h @ w2t + b2
    e = jnp.tanh(a1 + a2[:, None, :])
    scores = jnp.einsum('bth,h->bt', e, v_row)                       # (B, T)
    attn = jax.nn.softmax(scores, axis=1)
    context = jnp.einsum('bt,bth->bh', attn, encoder_outputs)        # (B, H)

    gi = jnp.concatenate([embedded, context], axis=1) @ wih_t + b_ih
    gh = h @ whh_t + b_hh
    r = jax.nn.sigmoid(gi[:, :H] + gh[:, :H])
    z = jax.nn.sigmoid(gi[:, H:2 * H] + gh[:, H:2 * H])
    n = jnp.tanh(gi[:, 2 * H:] + r * gh[:, 2 * H:])
    h_new = (1.0 - z) * n + z * h

    logits = jnp.concatenate([h_new, context], axis=1) @ wout_t + b_out
    return logits, h_new[None], attn


if __name__ == "__main__":
    raw_params = init_params(jax.random.PRNGKey(0))
    packed_params = pack_params(raw_params)

    k1, k2, k3 = jax.random.split(jax.random.PRNGKey(0), 3)
    input_token = jax.random.randint(k1, (BATCH, 1), 0, VOCAB, dtype=jnp.int32)
    hidden0 = jax.random.normal(k2, (NUM_LAYERS, BATCH, HID), jnp.float32)
    encoder_outputs = jax.random.normal(k3, (BATCH, SEQ, HID), jnp.float32)

    logits, hidden, attn = decoder_forward(input_token, hidden0, encoder_outputs, packed_params)
    logits, hidden, attn = jax.block_until_ready((logits, hidden, attn))

    ref_logits, ref_hidden, ref_attn = decoder_reference(
        input_token, hidden0, encoder_outputs, raw_params)
    assert logits.shape == (BATCH, VOCAB)
    assert hidden.shape == (NUM_LAYERS, BATCH, HID)
    assert attn.shape == (BATCH, SEQ)
    assert jnp.allclose(logits, ref_logits, atol=1e-5, rtol=1e-5)
    assert jnp.allclose(hidden, ref_hidden, atol=1e-5, rtol=1e-5)
    assert jnp.allclose(attn, ref_attn, atol=1e-5, rtol=1e-5)

    print("KERNEL_OK")
</pallas_src>

<mosaic_0001>
module attributes {stable_mosaic.version = 11 : i64} {
  func.func @decoder_step_kernel(%arg0: memref<2x32xf32, #tpu.memory_space<vmem>>, %arg1: memref<2x32xf32, #tpu.memory_space<vmem>>, %arg2: memref<2x8x32xf32, #tpu.memory_space<vmem>>, %arg3: memref<16x32xf32, #tpu.memory_space<vmem>>, %arg4: memref<200x128xf32, #tpu.memory_space<vmem>>, %arg5: memref<2x128xf32, #tpu.memory_space<vmem>>) attributes {dimension_semantics = [], scalar_prefetch = 0 : i64, scratch_operands = 0 : i64, tpu.core_type = #tpu.core_type<tc>} {
    %c0 = arith.constant 0 : index
    %c0_0 = arith.constant 0 : index
    %0 = vector.load %arg0[%c0, %c0_0] : memref<2x32xf32, #tpu.memory_space<vmem>>, vector<2x32xf32>
    %c0_1 = arith.constant 0 : index
    %c0_2 = arith.constant 0 : index
    %1 = vector.load %arg1[%c0_1, %c0_2] : memref<2x32xf32, #tpu.memory_space<vmem>>, vector<2x32xf32>
    %c0_3 = arith.constant 0 : index
    %c0_4 = arith.constant 0 : index
    %c0_5 = arith.constant 0 : index
    %2 = vector.load %arg2[%c0_3, %c0_4, %c0_5] : memref<2x8x32xf32, #tpu.memory_space<vmem>>, vector<2x8x32xf32>
    %c0_6 = arith.constant 0 : index
    %c0_7 = arith.constant 0 : index
    %3 = vector.load %arg3[%c0_6, %c0_7] : memref<16x32xf32, #tpu.memory_space<vmem>>, vector<16x32xf32>
    %c0_8 = arith.constant 0 : index
    %c0_9 = arith.constant 0 : index
    %4 = vector.load %arg4[%c0_8, %c0_9] : memref<200x128xf32, #tpu.memory_space<vmem>>, vector<32x128xf32>
    %c32 = arith.constant 32 : index
    %c0_10 = arith.constant 0 : index
    %5 = vector.load %arg4[%c32, %c0_10] : memref<200x128xf32, #tpu.memory_space<vmem>>, vector<32x32xf32>
    %c64 = arith.constant 64 : index
    %c0_11 = arith.constant 0 : index
    %6 = vector.load %arg4[%c64, %c0_11] : memref<200x128xf32, #tpu.memory_space<vmem>>, vector<64x96xf32>
    %c128 = arith.constant 128 : index
    %c0_12 = arith.constant 0 : index
    %7 = vector.load %arg4[%c128, %c0_12] : memref<200x128xf32, #tpu.memory_space<vmem>>, vector<64x32xf32>
    %c192 = arith.constant 192 : index
    %c0_13 = arith.constant 0 : index
    %8 = vector.load %arg4[%c192, %c0_13] : memref<200x128xf32, #tpu.memory_space<vmem>>, vector<1x128xf32>
    %c193 = arith.constant 193 : index
    %c0_14 = arith.constant 0 : index
    %9 = vector.load %arg4[%c193, %c0_14] : memref<200x128xf32, #tpu.memory_space<vmem>>, vector<1x96xf32>
    %c194 = arith.constant 194 : index
    %c0_15 = arith.constant 0 : index
    %10 = vector.load %arg4[%c194, %c0_15] : memref<200x128xf32, #tpu.memory_space<vmem>>, vector<1x32xf32>
    %c195 = arith.constant 195 : index
    %c0_16 = arith.constant 0 : index
    %11 = vector.load %arg4[%c195, %c0_16] : memref<200x128xf32, #tpu.memory_space<vmem>>, vector<1x32xf32>
    %cst = arith.constant dense<0.000000e+00> : vector<2x128xf32>
    %12 = tpu.matmul %1, %4, %cst {dimension_numbers = #tpu.dot_dimension_numbers<[1], [0], [0], [1], [0, 0, 1, 1], [], []>} : vector<2x32xf32>, vector<32x128xf32>, vector<2x128xf32> -> vector<2x128xf32>
    %13 = vector.broadcast %8 : vector<1x128xf32> to vector<2x128xf32>
    %14 = arith.addf %12, %13 : vector<2x128xf32>
    %15 = vector.extract_strided_slice %14 {offsets = [0, 0], sizes = [2, 32], strides = [1, 1]} : vector<2x128xf32> to vector<2x32xf32>
    %16 = vector.extract_strided_slice %14 {offsets = [0, 32], sizes = [2, 96], strides = [1, 1]} : vector<2x128xf32> to vector<2x96xf32>
    %cst_17 = arith.constant dense<0.000000e+00> : vector<16x32xf32>
    %17 = tpu.matmul %3, %5, %cst_17 {dimension_numbers = #tpu.dot_dimension_numbers<[1], [0], [0], [1], [0, 0, 1, 1], [], []>} : vector<16x32xf32>, vector<32x32xf32>, vector<16x32xf32> -> vector<16x32xf32>
    %18 = vector.shape_cast %17 : vector<16x32xf32> to vector<2x8x32xf32>
    %19 = vector.shape_cast %15 : vector<2x32xf32> to vector<2x1x32xf32>
    %20 = vector.broadcast %19 : vector<2x1x32xf32> to vector<2x8x32xf32>
    %21 = arith.addf %18, %20 : vector<2x8x32xf32>
    %22 = math.tanh %21 : vector<2x8x32xf32>
    %23 = vector.shape_cast %11 : vector<1x32xf32> to vector<1x1x32xf32>
    %24 = vector.broadcast %23 : vector<1x1x32xf32> to vector<2x8x32xf32>
    %25 = arith.mulf %22, %24 : vector<2x8x32xf32>
    %cst_18 = arith.constant dense<0.000000e+00> : vector<2x8xf32>
    %26 = vector.multi_reduction <add>, %25, %cst_18 [2] : vector<2x8x32xf32> to vector<2x8xf32>
    %cst_19 = arith.constant dense<0xFF800000> : vector<2xf32>
    %27 = vector.multi_reduction <maximumf>, %26, %cst_19 [1] : vector<2x8xf32> to vector<2xf32>
    %28 = vector.shape_cast %27 : vector<2xf32> to vector<2x1xf32>
    %29 = vector.broadcast %28 : vector<2x1xf32> to vector<2x8xf32>
    %30 = arith.subf %26, %29 : vector<2x8xf32>
    %31 = math.exp %30 : vector<2x8xf32>
    %cst_20 = arith.constant dense<0.000000e+00> : vector<2xf32>
    %32 = vector.multi_reduction <add>, %31, %cst_20 [1] : vector<2x8xf32> to vector<2xf32>
    %33 = vector.shape_cast %32 : vector<2xf32> to vector<2x1xf32>
    %34 = vector.broadcast %33 : vector<2x1xf32> to vector<2x8xf32>
    %35 = arith.divf %31, %34 : vector<2x8xf32>
    %36 = vector.shape_cast %35 : vector<2x8xf32> to vector<2x8x1xf32>
    %37 = vector.broadcast %36 : vector<2x8x1xf32> to vector<2x8x32xf32>
    %38 = arith.mulf %37, %2 : vector<2x8x32xf32>
    %cst_21 = arith.constant dense<0.000000e+00> : vector<2x32xf32>
    %39 = vector.multi_reduction <add>, %38, %cst_21 [1] : vector<2x8x32xf32> to vector<2x32xf32>
    %40 = tpu.concatenate %0, %39 in 1 : vector<2x32xf32>, vector<2x32xf32> -> vector<2x64xf32>
    %cst_22 = arith.constant dense<0.000000e+00> : vector<2x96xf32>
    %41 = tpu.matmul %40, %6, %cst_22 {dimension_numbers = #tpu.dot_dimension_numbers<[1], [0], [0], [1], [0, 0, 1, 1], [], []>} : vector<2x64xf32>, vector<64x96xf32>, vector<2x96xf32> -> vector<2x96xf32>
    %42 = vector.broadcast %9 : vector<1x96xf32> to vector<2x96xf32>
    %43 = arith.addf %41, %42 : vector<2x96xf32>
    %44 = vector.extract_strided_slice %43 {offsets = [0, 0], sizes = [2, 32], strides = [1, 1]} : vector<2x96xf32> to vector<2x32xf32>
    %45 = vector.extract_strided_slice %16 {offsets = [0, 0], sizes = [2, 32], strides = [1, 1]} : vector<2x96xf32> to vector<2x32xf32>
    %46 = arith.addf %44, %45 : vector<2x32xf32>
    %47 = arith.negf %46 : vector<2x32xf32>
    %48 = math.exp %47 : vector<2x32xf32>
    %cst_23 = arith.constant 1.000000e+00 : f32
    %49 = vector.broadcast %cst_23 : f32 to vector<2x32xf32>
    %50 = arith.addf %49, %48 : vector<2x32xf32>
    %51 = arith.divf %49, %50 : vector<2x32xf32>
    %52 = vector.extract_strided_slice %43 {offsets = [0, 32], sizes = [2, 32], strides = [1, 1]} : vector<2x96xf32> to vector<2x32xf32>
    %53 = vector.extract_strided_slice %16 {offsets = [0, 32], sizes = [2, 32], strides = [1, 1]} : vector<2x96xf32> to vector<2x32xf32>
    %54 = arith.addf %52, %53 : vector<2x32xf32>
    %55 = arith.negf %54 : vector<2x32xf32>
    %56 = math.exp %55 : vector<2x32xf32>
    %cst_24 = arith.constant 1.000000e+00 : f32
    %57 = vector.broadcast %cst_24 : f32 to vector<2x32xf32>
    %58 = arith.addf %57, %56 : vector<2x32xf32>
    %59 = arith.divf %57, %58 : vector<2x32xf32>
    %60 = vector.extract_strided_slice %43 {offsets = [0, 64], sizes = [2, 32], strides = [1, 1]} : vector<2x96xf32> to vector<2x32xf32>
    %61 = vector.extract_strided_slice %16 {offsets = [0, 64], sizes = [2, 32], strides = [1, 1]} : vector<2x96xf32> to vector<2x32xf32>
    %62 = arith.mulf %51, %61 : vector<2x32xf32>
    %63 = arith.addf %60, %62 : vector<2x32xf32>
    %64 = math.tanh %63 : vector<2x32xf32>
    %cst_25 = arith.constant 1.000000e+00 : f32
    %65 = vector.broadcast %cst_25 : f32 to vector<2x32xf32>
    %66 = arith.subf %65, %59 : vector<2x32xf32>
    %67 = arith.mulf %66, %64 : vector<2x32xf32>
    %68 = arith.mulf %59, %1 : vector<2x32xf32>
    %69 = arith.addf %67, %68 : vector<2x32xf32>
    %70 = tpu.concatenate %69, %39 in 1 : vector<2x32xf32>, vector<2x32xf32> -> vector<2x64xf32>
    %cst_26 = arith.constant dense<0.000000e+00> : vector<2x32xf32>
    %71 = tpu.matmul %70, %7, %cst_26 {dimension_numbers = #tpu.dot_dimension_numbers<[1], [0], [0], [1], [0, 0, 1, 1], [], []>} : vector<2x64xf32>, vector<64x32xf32>, vector<2x32xf32> -> vector<2x32xf32>
    %72 = vector.broadcast %10 : vector<1x32xf32> to vector<2x32xf32>
    %73 = arith.addf %71, %72 : vector<2x32xf32>
    %cst_27 = arith.constant 0.000000e+00 : f32
    %74 = vector.broadcast %cst_27 : f32 to vector<2x56xf32>
    %75 = tpu.concatenate %73, %69, %35, %74 in 1 : vector<2x32xf32>, vector<2x32xf32>, vector<2x8xf32>, vector<2x56xf32> -> vector<2x128xf32>
    %c0_28 = arith.constant 0 : index
    %c0_29 = arith.constant 0 : index
    %76 = vector.load %arg5[%c0_28, %c0_29] : memref<2x128xf32, #tpu.memory_space<vmem>>, vector<2x128xf32>
    tpu.vector_store %arg5[%c0_28, %c0_29], %75 {strides = array<i32>} : memref<2x128xf32, #tpu.memory_space<vmem>>, vector<2x128xf32>,
    return
  }
}

</mosaic_0001>

<llo_original>
// kernel: tpu_custom_call.1
$region0: #{tpu_custom_call.1}
  #allocation0 [shape = 'u32[]', space=smem, size = 0x4, offset = 0x4, fixed_abs, tag = 'smem constant byte address 0x4 - core index']
  #allocation1 [shape = 'u32[144,128]{1,0:T(1,128)}', space=vmem, size = 0x12000, scoped, tag = 'internal scratch']
  %s0 = inlined_call_operand.hbm [shape: f32[2,32], index: 0, kind: input, shape index: {}]
  %s1 = inlined_call_operand.hbm [shape: f32[2,32], index: 1, kind: input, shape index: {}]
  %s2 = inlined_call_operand.hbm [shape: f32[2,8,32], index: 2, kind: input, shape index: {}]
  %s3 = inlined_call_operand.hbm [shape: f32[16,32], index: 3, kind: input, shape index: {}]
  %s4 = inlined_call_operand.hbm [shape: f32[200,128], index: 4, kind: input, shape index: {}]
  %s5 = inlined_call_operand.hbm [shape: f32[2,128], index: 5, kind: output, shape index: {}]
  %s6 = sld [smem:[#allocation0]]
  $region50: #{tpu_custom_call.1} parent=0
    _
  %s8 = ssub.s32 1, %s6
  %s9 = scalar_select 0, %s8, %s6
  $region1: #{tpu_custom_call.1} parent=0
    #allocation2 [shape = 'u8[1024]{0}', space=vmem, size = 0x400, scoped, tag = 'input window, operand 0, single buffered']
    #allocation3 [shape = 's32[1]{0}', space=sflag, size = 0x4, scoped, tag = 'scoped memory for tpu_custom_call.1']
    #allocation4 [shape = 's32[1]{0}', space=sflag, size = 0x4, scoped, tag = 'scoped memory for tpu_custom_call.1']
    #allocation5 [shape = 'u8[1024]{0}', space=vmem, size = 0x400, scoped, tag = 'input window, operand 1, single buffered']
    #allocation6 [shape = 's32[1]{0}', space=sflag, size = 0x4, scoped, tag = 'scoped memory for tpu_custom_call.1']
    #allocation7 [shape = 'u8[8192]{0}', space=vmem, size = 0x2000, scoped, tag = 'input window, operand 2, single buffered']
    #allocation8 [shape = 'u8[8192]{0}', space=vmem, size = 0x2000, scoped, tag = 'input window, operand 3, single buffered']
    #allocation9 [shape = 's32[1]{0}', space=sflag, size = 0x4, scoped, tag = 'scoped memory for tpu_custom_call.1']
    #allocation10 [shape = 'u8[102400]{0}', space=vmem, size = 0x19000, scoped, tag = 'input window, operand 4, single buffered']
    #allocation11 [shape = 'u8[1024]{0}', space=vmem, size = 0x400, scoped, tag = 'output window, operand 0, single buffered']
    %10 = vsyncpa [#allocation3], 0
    %11 = vsyncpa [#allocation6], 0
    %12 = vsyncpa [#allocation9], 0
    %13 = vsyncpa [#allocation4], 0
    // Predicated region
    $region2: #{tpu_custom_call.1} parent=1 // pred_check
      _
    $region3: #{tpu_custom_call.1} parent=1 // pred_check_branch
      %15 = sbr.rel (0) target = $region5
    $region4: #{tpu_custom_call.1} parent=1 // pred_region
      %s17 = ssub.s32 32, 32
      %18 = vsyncadd [#allocation3], %s17
      %s20 = sshll.u32 [#allocation2], 4
      %s21 = int_to_ptr.vmem [resolvable:$true] %s20
      %23 = dma.hbm_to_vmem [thread:$0]  %s0, 32, %s21, [#allocation3]
    $region5: #{tpu_custom_call.1} parent=1 // pred_fallthru
      _
    // Predicated region
    $region6: #{tpu_custom_call.1} parent=1 // pred_check
      _
    $region7: #{tpu_custom_call.1} parent=1 // pred_check_branch
      %25 = sbr.rel (0) target = $region9
    $region8: #{tpu_custom_call.1} parent=1 // pred_region
      %s27 = ssub.s32 32, 32
      %28 = vsyncadd [#allocation6], %s27
      %s30 = sshll.u32 [#allocation5], 4
      %s31 = int_to_ptr.vmem [resolvable:$true] %s30
      %33 = dma.hbm_to_vmem [thread:$0]  %s1, 32, %s31, [#allocation6]
    $region9: #{tpu_custom_call.1} parent=1 // pred_fallthru
      _
    // Predicated region
    $region10: #{tpu_custom_call.1} parent=1 // pred_check
      _
    $region11: #{tpu_custom_call.1} parent=1 // pred_check_branch
      %35 = sbr.rel (0) target = $region13
    $region12: #{tpu_custom_call.1} parent=1 // pred_region
      %s37 = ssub.s32 256, 256
      %38 = vsyncadd [#allocation6], %s37
      %s39 = sshll.u32 [#allocation7], 4
      %s40 = int_to_ptr.vmem [resolvable:$true] %s39
      %45 = dma.hbm_to_vmem [thread:$0]  %s2, 256, %s40, [#allocation6], 128, 128, 8
    $region13: #{tpu_custom_call.1} parent=1 // pred_fallthru
      _
    // Predicated region
    $region14: #{tpu_custom_call.1} parent=1 // pred_check
      _
    $region15: #{tpu_custom_call.1} parent=1 // pred_check_branch
      %47 = sbr.rel (0) target = $region17
    $region16: #{tpu_custom_call.1} parent=1 // pred_region
      %s49 = ssub.s32 256, 256
      %50 = vsyncadd [#allocation9], %s49
      %s51 = sshll.u32 [#allocation8], 4
      %s52 = int_to_ptr.vmem [resolvable:$true] %s51
      %57 = dma.hbm_to_vmem [thread:$0]  %s3, 256, %s52, [#allocation9], 128, 128, 8
    $region17: #{tpu_custom_call.1} parent=1 // pred_fallthru
      _
    // Predicated region
    $region18: #{tpu_custom_call.1} parent=1 // pred_check
      _
    $region19: #{tpu_custom_call.1} parent=1 // pred_check_branch
      %59 = sbr.rel (0) target = $region21
    $region20: #{tpu_custom_call.1} parent=1 // pred_region
      %s61 = ssub.s32 3200, 3200
      %62 = vsyncadd [#allocation9], %s61
      %s63 = sshll.u32 [#allocation10], 4
      %s64 = int_to_ptr.vmem [resolvable:$true] %s63
      %69 = dma.hbm_to_vmem [thread:$0]  %s4, 3200, %s64, [#allocation9], 128, 128, 8
    $region21: #{tpu_custom_call.1} parent=1 // pred_fallthru
      _
    // Predicated region
    $region22: #{tpu_custom_call.1} parent=1 // pred_check
      _
    $region23: #{tpu_custom_call.1} parent=1 // pred_check_branch
      %71 = sbr.rel (0) target = $region25
    $region24: #{tpu_custom_call.1} parent=1 // pred_region
      %72 = dma.done [#allocation3], 32
    $region25: #{tpu_custom_call.1} parent=1 // pred_fallthru
      _
    // Predicated region
    $region26: #{tpu_custom_call.1} parent=1 // pred_check
      _
    $region27: #{tpu_custom_call.1} parent=1 // pred_check_branch
      %74 = sbr.rel (0) target = $region29
    $region28: #{tpu_custom_call.1} parent=1 // pred_region
      %75 = dma.done [#allocation6], 32
    $region29: #{tpu_custom_call.1} parent=1 // pred_fallthru
      _
    // Predicated region
    $region30: #{tpu_custom_call.1} parent=1 // pred_check
      _
    $region31: #{tpu_custom_call.1} parent=1 // pred_check_branch
      %77 = sbr.rel (0) target = $region33
    $region32: #{tpu_custom_call.1} parent=1 // pred_region
      %78 = dma.done [#allocation6], 256
    $region33: #{tpu_custom_call.1} parent=1 // pred_fallthru
      _
    // Predicated region
    $region34: #{tpu_custom_call.1} parent=1 // pred_check
      _
    $region35: #{tpu_custom_call.1} parent=1 // pred_check_branch
      %80 = sbr.rel (0) target = $region37
    $region36: #{tpu_custom_call.1} parent=1 // pred_region
      %81 = dma.done [#allocation9], 256
    $region37: #{tpu_custom_call.1} parent=1 // pred_fallthru
      _
    // Predicated region
    $region38: #{tpu_custom_call.1} parent=1 // pred_check
      _
    $region39: #{tpu_custom_call.1} parent=1 // pred_check_branch
      %83 = sbr.rel (0) target = $region41
    $region40: #{tpu_custom_call.1} parent=1 // pred_region
      %84 = dma.done [#allocation9], 3200
    $region41: #{tpu_custom_call.1} parent=1 // pred_fallthru
      _
    %v85 = vld [vmem:[#allocation2] sm:$0x3]
    %v86 = vld [vmem:[#allocation5] sm:$0x3]
    %v87 = vld [vmem:[#allocation7] sm:$0xff]
    %v88 = vld [vmem:[#allocation7 + $0x8] sm:$0xff]
    %v89 = vld [vmem:[#allocation8] sm:$0xff]
    %v90 = vld [vmem:[#allocation8 + $0x8] sm:$0xff]
    %v91 = vld [vmem:[#allocation10] sm:$0xff]
    %v92 = vld [vmem:[#allocation10 + $0x8] sm:$0xff]
    %v93 = vld [vmem:[#allocation10 + $0x10] sm:$0xff]
    %v94 = vld [vmem:[#allocation10 + $0x18] sm:$0xff]
    %v95 = vld [vmem:[#allocation10 + $0x20] sm:$0xff]
    %v96 = vld [vmem:[#allocation10 + $0x28] sm:$0xff]
    %v97 = vld [vmem:[#allocation10 + $0x30] sm:$0xff]
    %v98 = vld [vmem:[#allocation10 + $0x38] sm:$0xff]
    %v99 = vld [vmem:[#allocation10 + $0x40] sm:$0xff]
    %v100 = vld [vmem:[#allocation10 + $0x48] sm:$0xff]
    %v101 = vld [vmem:[#allocation10 + $0x50] sm:$0xff]
    %v102 = vld [vmem:[#allocation10 + $0x58] sm:$0xff]
    %v103 = vld [vmem:[#allocation10 + $0x60] sm:$0xff]
    %v104 = vld [vmem:[#allocation10 + $0x68] sm:$0xff]
    %v105 = vld [vmem:[#allocation10 + $0x70] sm:$0xff]
    %v106 = vld [vmem:[#allocation10 + $0x78] sm:$0xff]
    %v107 = vld [vmem:[#allocation10 + $0x80] sm:$0xff]
    %v108 = vld [vmem:[#allocation10 + $0x88] sm:$0xff]
    %v109 = vld [vmem:[#allocation10 + $0x90] sm:$0xff]
    %v110 = vld [vmem:[#allocation10 + $0x98] sm:$0xff]
    %v111 = vld [vmem:[#allocation10 + $0xa0] sm:$0xff]
    %v112 = vld [vmem:[#allocation10 + $0xa8] sm:$0xff]
    %v113 = vld [vmem:[#allocation10 + $0xb0] sm:$0xff]
    %v114 = vld [vmem:[#allocation10 + $0xb8] sm:$0xff]
    %v115 = vld [vmem:[#allocation10 + $0xc0] sm:$0x1]
    %v116 = vld [vmem:[#allocation10 + $0xc1] sm:$0x1]
    %v117 = vld [vmem:[#allocation10 + $0xc2] sm:$0x1]
    %v118 = vld [vmem:[#allocation10 + $0xc3] sm:$0x1]
    %v119 = vlaneseq
    %v120 = vshrl.u32 %v119, 7
    %v121 = vsub.s32 0, %v120
    %v122 = vrot.slane %v115, %v121
    %vm123 = vcmask 261120
    %v125 = vsel %vm123, %v86, 0
    %127 = vmatprep.subr.mxu0 0.0
    %128 = vmatpush1.msra.mxu0 0.0
    %129 = vmatprep.subr.mxu0 0.0
    %130 = vmatpush1.msra.mxu0 0.0
    %131 = vmatprep.subr.mxu0 0.0
    %132 = vmatpush1.msra.mxu0 0.0
    %133 = vmatprep.subr.mxu0 0.0
    %134 = vmatpush1.msra.mxu0 0.0
    %135 = vmatprep.subr.mxu0 0.0
    %136 = vmatpush1.msra.mxu0 0.0
    %137 = vmatprep.subr.mxu0 0.0
    %138 = vmatpush1.msra.mxu0 0.0
    %139 = vmatprep.subr.mxu0 0.0
    %140 = vmatpush1.msra.mxu0 0.0
    %141 = vmatprep.subr.mxu0 0.0
    %142 = vmatpush1.msra.mxu0 0.0
    %143 = vmatprep.subr.mxu0 0.0
    %144 = vmatpush1.msra.mxu0 0.0
    %145 = vmatprep.subr.mxu0 0.0
    %146 = vmatpush1.msra.mxu0 0.0
    %147 = vmatprep.subr.mxu0 0.0
    %148 = vmatpush1.msra.mxu0 0.0
    %149 = vmatprep.subr.mxu0 0.0
    %150 = vmatpush1.msra.mxu0 0.0
    %151 = vmatprep.subr.mxu0 0.0
    %152 = vmatpush1.msra.mxu0 %v94
    %153 = vmatprep.subr.mxu0 0.0
    %154 = vmatpush1.msra.mxu0 %v93
    %155 = vmatprep.subr.mxu0 0.0
    %156 = vmatpush1.msra.mxu0 %v92
    %157 = vmatprep.subr.mxu0 0.0
    %158 = vmatpush1.msra.mxu0 %v91
    %159 = vmatprep.subr.mxu0 0.0
    %160 = vmatpush2.msra.mxu0 0.0
    %161 = vmatprep.subr.mxu0 0.0
    %162 = vmatpush2.msra.mxu0 0.0
    %163 = vmatprep.subr.mxu0 0.0
    %164 = vmatpush2.msra.mxu0 0.0
    %165 = vmatprep.subr.mxu0 0.0
    %166 = vmatpush2.msra.mxu0 0.0
    %167 = vmatprep.subr.mxu0 0.0
    %168 = vmatpush2.msra.mxu0 0.0
    %169 = vmatprep.subr.mxu0 0.0
    %170 = vmatpush2.msra.mxu0 0.0
    %171 = vmatprep.subr.mxu0 0.0
    %172 = vmatpush2.msra.mxu0 0.0
    %173 = vmatprep.subr.mxu0 0.0
    %174 = vmatpush2.msra.mxu0 0.0
    %175 = vmatprep.subr.mxu0 0.0
    %176 = vmatpush2.msra.mxu0 0.0
    %177 = vmatprep.subr.mxu0 0.0
    %178 = vmatpush2.msra.mxu0 0.0
    %179 = vmatprep.subr.mxu0 0.0
    %180 = vmatpush2.msra.mxu0 0.0
    %181 = vmatprep.subr.mxu0 0.0
    %182 = vmatpush2.msra.mxu0 0.0
    %183 = vmatprep.subr.mxu0 0.0
    %184 = vmatpush2.msra.mxu0 0.0
    %185 = vmatprep.subr.mxu0 0.0
    %186 = vmatpush2.msra.mxu0 0.0
    %187 = vmatprep.subr.mxu0 0.0
    %188 = vmatpush2.msra.mxu0 0.0
    %189 = vmatprep.subr.mxu0 0.0
    %190 = vmatpush2.msra.mxu0 0.0
    %191 = vmatprep.mubr.f32.mxu0 0.0
    %192 = vmatmul.mubr.f32.gmra.mxu0 %v125
    %v193 = vpop.f32.mrf.mxu0
    %v194 = vadd.f32 %v122, %v193
    %v195 = vpop.f32.mrf.mxu0
    %196 = vdwg.mxu0
    %v198 = vsel %vm123, %v89, 0
    %v201 = vsel %vm123, %v90, 0
    %203 = vmatprep.subr.mxu0 0.0
    %204 = vmatpush1.msra.mxu0 0.0
    %205 = vmatprep.subr.mxu0 0.0
    %206 = vmatpush1.msra.mxu0 0.0
    %207 = vmatprep.subr.mxu0 0.0
    %208 = vmatpush1.msra.mxu0 0.0
    %209 = vmatprep.subr.mxu0 0.0
    %210 = vmatpush1.msra.mxu0 0.0
    %211 = vmatprep.subr.mxu0 0.0
    %212 = vmatpush1.msra.mxu0 0.0
    %213 = vmatprep.subr.mxu0 0.0
    %214 = vmatpush1.msra.mxu0 0.0
    %215 = vmatprep.subr.mxu0 0.0
    %216 = vmatpush1.msra.mxu0 0.0
    %217 = vmatprep.subr.mxu0 0.0
    %218 = vmatpush1.msra.mxu0 0.0
    %219 = vmatprep.subr.mxu0 0.0
    %220 = vmatpush1.msra.mxu0 0.0
    %221 = vmatprep.subr.mxu0 0.0
    %222 = vmatpush1.msra.mxu0 0.0
    %223 = vmatprep.subr.mxu0 0.0
    %224 = vmatpush1.msra.mxu0 0.0
    %225 = vmatprep.subr.mxu0 0.0
    %226 = vmatpush1.msra.mxu0 0.0
    %227 = vmatprep.subr.mxu0 0.0
    %228 = vmatpush1.msra.mxu0 %v98
    %229 = vmatprep.subr.mxu0 0.0
    %230 = vmatpush1.msra.mxu0 %v97
    %231 = vmatprep.subr.mxu0 0.0
    %232 = vmatpush1.msra.mxu0 %v96
    %233 = vmatprep.subr.mxu0 0.0
    %234 = vmatpush1.msra.mxu0 %v95
    %235 = vmatprep.subr.mxu0 0.0
    %236 = vmatpush2.msra.mxu0 0.0
    %237 = vmatprep.subr.mxu0 0.0
    %238 = vmatpush2.msra.mxu0 0.0
    %239 = vmatprep.subr.mxu0 0.0
    %240 = vmatpush2.msra.mxu0 0.0
    %241 = vmatprep.subr.mxu0 0.0
    %242 = vmatpush2.msra.mxu0 0.0
    %243 = vmatprep.subr.mxu0 0.0
    %244 = vmatpush2.msra.mxu0 0.0
    %245 = vmatprep.subr.mxu0 0.0
    %246 = vmatpush2.msra.mxu0 0.0
    %247 = vmatprep.subr.mxu0 0.0
    %248 = vmatpush2.msra.mxu0 0.0
    %249 = vmatprep.subr.mxu0 0.0
    %250 = vmatpush2.msra.mxu0 0.0
    %251 = vmatprep.subr.mxu0 0.0
    %252 = vmatpush2.msra.mxu0 0.0
    %253 = vmatprep.subr.mxu0 0.0
    %254 = vmatpush2.msra.mxu0 0.0
    %255 = vmatprep.subr.mxu0 0.0
    %256 = vmatpush2.msra.mxu0 0.0
    %257 = vmatprep.subr.mxu0 0.0
    %258 = vmatpush2.msra.mxu0 0.0
    %259 = vmatprep.subr.mxu0 0.0
    %260 = vmatpush2.msra.mxu0 0.0
    %261 = vmatprep.subr.mxu0 0.0
    %262 = vmatpush2.msra.mxu0 0.0
    %263 = vmatprep.subr.mxu0 0.0
    %264 = vmatpush2.msra.mxu0 0.0
    %265 = vmatprep.subr.mxu0 0.0
    %266 = vmatpush2.msra.mxu0 0.0
    %267 = vmatprep.mubr.f32.mxu0 0.0
    %268 = vmatmul.mubr.f32.gmra.mxu0 %v198
    %v269 = vpop.f32.mrf.mxu0
    %v270 = vadd.f32 0.0, %v269
    %v271 = vpop.f32.mrf.mxu0
    %272 = vmatprep.mubr.f32.mxu0 0.0
    %273 = vmatmul.mubr.f32.gmra.mxu0 %v201
    %v274 = vpop.f32.mrf.mxu0
    %v275 = vadd.f32 0.0, %v274
    %v276 = vpop.f32.mrf.mxu0
    %277 = vdwg.mxu0
    %v280 = vunpack.c.l.s4 1966171168
    %v281 = vunpack.c.0.s8 %v280
    %v282 = vlaneseq
    %v283 = vshrl.u32 %v282, 7
    %v284 = vsub.s32 %v281, %v283
    %v285 = vrot.slane %v194, %v284
    %v286 = vcombine.high %v285, %v285
    %v288 = vunpack.c.l.s4 1966171168
    %v289 = vunpack.c.0.s8 %v288
    %v290 = vlaneseq
    %v291 = vshrl.u32 %v290, 7
    %v292 = vsub.s32 %v289, %v291
    %v293 = vrot.slane %v285, %v292
    %v295 = vunpack.c.l.s4 1966171168
    %v296 = vunpack.c.0.s8 %v295
    %v297 = vlaneseq
    %v298 = vshrl.u32 %v297, 7
    %v299 = vsub.s32 %v296, %v298
    %v300 = vrot.slane %v286, %v299
    %v301 = vlaneseq
    %v302 = vshrl.u32 %v301, 7
    %v303 = vsub.s32 0, %v302
    %v304 = vrot.slane %v293, %v303
    %v305 = vlaneseq
    %v306 = vshrl.u32 %v305, 7
    %v307 = vsub.s32 0, %v306
    %v308 = vrot.slane %v300, %v307
    %v311 = vadd.f32 %v270, %v304
    %v312 = vadd.f32 %v275, %v308
    %v313 = vtanh.pop %v311
    %v314 = vtanh.pop %v312
    %v315 = vlaneseq
    %v316 = vshrl.u32 %v315, 7
    %v317 = vsub.s32 0, %v316
    %v318 = vrot.slane %v118, %v317
    %v319 = vmul.f32 %v313, %v318
    %v320 = vmul.f32 %v314, %v318
    %v321 = vsel %vm123, %v319, 0.0
    %322 = vadd.xlane.f32.xlu0 %v321
    %v323 = vpop.xlane.xlu0 %322
    %v324 = vsel %vm123, %v320, 0.0
    %325 = vadd.xlane.f32.xlu0 %v324
    %v326 = vpop.xlane.xlu0 %325
    %v329 = vlaneseq
    %v330 = vand.u32 %v329, 127
    %v331 = vlaneseq
    %v332 = vshrl.u32 %v331, 7
    %v333 = vsub.s32 %v330, %v332
    %v334 = vrot.slane %v323, %v333
    %v335 = vlaneseq
    %v336 = vshrl.u32 %v335, 7
    %v337 = vsub.s32 %v330, %v336
    %v338 = vrot.slane %v326, %v337
    %vm339 = vcmask 1041409
    %v340 = vsel %vm339, %v338, %v334
    %vm342 = vcmask 58368
    %v343 = vsel %vm342, %v340, -inf
    %344 = vmax.xlane.f32.xlu0 %v343
    %v345 = vpop.xlane.xlu0 %344
    %v347 = vlaneseq
    %v348 = vshrl.u32 %v347, 7
    %v349 = vsub.s32 0, %v348
    %v350 = vrot.slane %v345, %v349
    %v351 = vlaneseq
    %v352 = vshrl.u32 %v351, 7
    %v353 = vsub.s32 1, %v352
    %v354 = vrot.slane %v345, %v353
    %v357 = vsub.f32 %v323, %v350
    %v358 = vsub.f32 %v326, %v354
    %v359 = vmul.f32 %v357, 1.442695
    %v360 = vpow.pop %v359
    %v361 = vmul.f32 %v358, 1.442695
    %v362 = vpow.pop %v361
    %365 = vset.pattern.permute.xlu0 0
    %366 = vperm.xlu0 %365, %v360
    %v367 = vpop.permute.xlu0 %366
    %368 = vset.pattern.permute.xlu0 0
    %369 = vperm.xlu0 %368, %v362
    %v370 = vpop.permute.xlu0 %369
    %v371 = vlaneseq
    %v372 = vshrl.u32 %v371, 7
    %v373 = vsub.s32 %v330, %v372
    %v374 = vrot.slane %v367, %v373
    %v375 = vlaneseq
    %v376 = vshrl.u32 %v375, 7
    %v377 = vsub.s32 %v330, %v376
    %v378 = vrot.slane %v370, %v377
    %v379 = vsel %vm339, %v378, %v374
    %v381 = vsel %vm342, %v379, 0.0
    %382 = vadd.xlane.f32.xlu0 %v381
    %v383 = vpop.xlane.xlu0 %382
    %v385 = vlaneseq
    %v386 = vshrl.u32 %v385, 7
    %v387 = vsub.s32 0, %v386
    %v388 = vrot.slane %v383, %v387
    %v389 = vlaneseq
    %v390 = vshrl.u32 %v389, 7
    %v391 = vsub.s32 1, %v390
    %v392 = vrot.slane %v383, %v391
    %v395 = vrcp.pop %v388
    %v396 = vmul.f32 %v360, %v395
    %v397 = vrcp.pop %v392
    %v398 = vmul.f32 %v362, %v397
    %400 = vset.pattern.permute.xlu0 0
    %401 = vperm.xlu0 %400, %v396
    %v402 = vpop.permute.xlu0 %401
    %405 = vset.pattern.permute.xlu0 0
    %406 = vperm.xlu0 %405, %v398
    %v407 = vpop.permute.xlu0 %406
    %v409 = vmul.f32 %v402, %v87
    %v410 = vmul.f32 %v407, %v88
    %v411 = vsel %vm123, %v409, 0.0
    %v412 = vrot.slane %v411, 4
    %v413 = vadd.f32 %v411, %v412
    %v414 = vrot.slane %v413, 2
    %v415 = vadd.f32 %v413, %v414
    %v416 = vrot.slane %v415, 1
    %v417 = vadd.f32 %v415, %v416
    %v418 = vsel %vm123, %v410, 0.0
    %v419 = vrot.slane %v418, 4
    %v420 = vadd.f32 %v418, %v419
    %v421 = vrot.slane %v420, 2
    %v422 = vadd.f32 %v420, %v421
    %v423 = vrot.slane %v422, 1
    %v424 = vadd.f32 %v422, %v423
    %v427 = vsel %vm339, %v424, %v417
    %428 = vrot.lane.b32.xlu0 %v427, 32
    %v429 = vpop.permute.xlu0 %428
    %v431 = vsel %vm123, %v85, %v429
    %v432 = vlaneseq
    %v433 = vshrl.u32 %v432, 7
    %v434 = vsub.s32 0, %v433
    %v435 = vrot.slane %v116, %v434
    %vm436 = vcmask 523264
    %v438 = vsel %vm436, %v431, 0
    %440 = vmatprep.subr.mxu0 0.0
    %441 = vmatpush1.msra.mxu0 0.0
    %442 = vmatprep.subr.mxu0 0.0
    %443 = vmatpush1.msra.mxu0 0.0
    %444 = vmatprep.subr.mxu0 0.0
    %445 = vmatpush1.msra.mxu0 0.0
    %446 = vmatprep.subr.mxu0 0.0
    %447 = vmatpush1.msra.mxu0 0.0
    %448 = vmatprep.subr.mxu0 0.0
    %449 = vmatpush1.msra.mxu0 0.0
    %450 = vmatprep.subr.mxu0 0.0
    %451 = vmatpush1.msra.mxu0 0.0
    %452 = vmatprep.subr.mxu0 0.0
    %453 = vmatpush1.msra.mxu0 0.0
    %454 = vmatprep.subr.mxu0 0.0
    %455 = vmatpush1.msra.mxu0 0.0
    %456 = vmatprep.subr.mxu0 0.0
    %457 = vmatpush1.msra.mxu0 %v106
    %458 = vmatprep.subr.mxu0 0.0
    %459 = vmatpush1.msra.mxu0 %v105
    %460 = vmatprep.subr.mxu0 0.0
    %461 = vmatpush1.msra.mxu0 %v104
    %462 = vmatprep.subr.mxu0 0.0
    %463 = vmatpush1.msra.mxu0 %v103
    %464 = vmatprep.subr.mxu0 0.0
    %465 = vmatpush1.msra.mxu0 %v102
    %466 = vmatprep.subr.mxu0 0.0
    %467 = vmatpush1.msra.mxu0 %v101
    %468 = vmatprep.subr.mxu0 0.0
    %469 = vmatpush1.msra.mxu0 %v100
    %470 = vmatprep.subr.mxu0 0.0
    %471 = vmatpush1.msra.mxu0 %v99
    %472 = vmatprep.subr.mxu0 0.0
    %473 = vmatpush2.msra.mxu0 0.0
    %474 = vmatprep.subr.mxu0 0.0
    %475 = vmatpush2.msra.mxu0 0.0
    %476 = vmatprep.subr.mxu0 0.0
    %477 = vmatpush2.msra.mxu0 0.0
    %478 = vmatprep.subr.mxu0 0.0
    %479 = vmatpush2.msra.mxu0 0.0
    %480 = vmatprep.subr.mxu0 0.0
    %481 = vmatpush2.msra.mxu0 0.0
    %482 = vmatprep.subr.mxu0 0.0
    %483 = vmatpush2.msra.mxu0 0.0
    %484 = vmatprep.subr.mxu0 0.0
    %485 = vmatpush2.msra.mxu0 0.0
    %486 = vmatprep.subr.mxu0 0.0
    %487 = vmatpush2.msra.mxu0 0.0
    %488 = vmatprep.subr.mxu0 0.0
    %489 = vmatpush2.msra.mxu0 0.0
    %490 = vmatprep.subr.mxu0 0.0
    %491 = vmatpush2.msra.mxu0 0.0
    %492 = vmatprep.subr.mxu0 0.0
    %493 = vmatpush2.msra.mxu0 0.0
    %494 = vmatprep.subr.mxu0 0.0
    %495 = vmatpush2.msra.mxu0 0.0
    %496 = vmatprep.subr.mxu0 0.0
    %497 = vmatpush2.msra.mxu0 0.0
    %498 = vmatprep.subr.mxu0 0.0
    %499 = vmatpush2.msra.mxu0 0.0
    %500 = vmatprep.subr.mxu0 0.0
    %501 = vmatpush2.msra.mxu0 0.0
    %502 = vmatprep.subr.mxu0 0.0
    %503 = vmatpush2.msra.mxu0 0.0
    %504 = vmatprep.mubr.f32.mxu0 0.0
    %505 = vmatmul.mubr.f32.gmra.mxu0 %v438
    %v506 = vpop.f32.mrf.mxu0
    %v507 = vadd.f32 %v435, %v506
    %v508 = vpop.f32.mrf.mxu0
    %509 = vdwg.mxu0
    %510 = vrot.lane.b32.xlu0 %v194, 96
    %v511 = vpop.permute.xlu0 %510
    %v513 = vadd.f32 %v507, %v511
    %v514 = vxor.u32 %v513, 2147483648
    %v515 = vmul.f32 %v514, 1.442695
    %v516 = vpow.pop %v515
    %v517 = vadd.f32 %v516, 1.0
    %v518 = vrcp.pop %v517
    %v519 = vmul.f32 1.0, %v518
    %520 = vrot.lane.b32.xlu0 %v194, 32
    %v521 = vpop.permute.xlu0 %520
    %v523 = vmul.f32 %v519, %v521
    %525 = vrot.lane.b32.xlu0 %v523, 64
    %v526 = vpop.permute.xlu0 %525
    %v528 = vadd.f32 %v507, %v526
    %v529 = vtanh.pop %v528
    %v530 = vsub.f32 1.0, %v519
    %532 = vrot.lane.b32.xlu0 %v529, 96
    %v533 = vpop.permute.xlu0 %532
    %v535 = vmul.f32 %v530, %v533
    %536 = vrot.lane.b32.xlu0 %v86, 32
    %v537 = vpop.permute.xlu0 %536
    %v539 = vmul.f32 %v519, %v537
    %v540 = vadd.f32 %v535, %v539
    %542 = vrot.lane.b32.xlu0 %v540, 96
    %v543 = vpop.permute.xlu0 %542
    %v545 = vsel %vm123, %v543, %v429
    %v546 = vlaneseq
    %v547 = vshrl.u32 %v546, 7
    %v548 = vsub.s32 0, %v547
    %v549 = vrot.slane %v117, %v548
    %v551 = vsel %vm436, %v545, 0
    %553 = vmatprep.subr.mxu0 0.0
    %554 = vmatpush1.msra.mxu0 0.0
    %555 = vmatprep.subr.mxu0 0.0
    %556 = vmatpush1.msra.mxu0 0.0
    %557 = vmatprep.subr.mxu0 0.0
    %558 = vmatpush1.msra.mxu0 0.0
    %559 = vmatprep.subr.mxu0 0.0
    %560 = vmatpush1.msra.mxu0 0.0
    %561 = vmatprep.subr.mxu0 0.0
    %562 = vmatpush1.msra.mxu0 0.0
    %563 = vmatprep.subr.mxu0 0.0
    %564 = vmatpush1.msra.mxu0 0.0
    %565 = vmatprep.subr.mxu0 0.0
    %566 = vmatpush1.msra.mxu0 0.0
    %567 = vmatprep.subr.mxu0 0.0
    %568 = vmatpush1.msra.mxu0 0.0
    %569 = vmatprep.subr.mxu0 0.0
    %570 = vmatpush1.msra.mxu0 %v114
    %571 = vmatprep.subr.mxu0 0.0
    %572 = vmatpush1.msra.mxu0 %v113
    %573 = vmatprep.subr.mxu0 0.0
    %574 = vmatpush1.msra.mxu0 %v112
    %575 = vmatprep.subr.mxu0 0.0
    %576 = vmatpush1.msra.mxu0 %v111
    %577 = vmatprep.subr.mxu0 0.0
    %578 = vmatpush1.msra.mxu0 %v110
    %579 = vmatprep.subr.mxu0 0.0
    %580 = vmatpush1.msra.mxu0 %v109
    %581 = vmatprep.subr.mxu0 0.0
    %582 = vmatpush1.msra.mxu0 %v108
    %583 = vmatprep.subr.mxu0 0.0
    %584 = vmatpush1.msra.mxu0 %v107
    %585 = vmatprep.subr.mxu0 0.0
    %586 = vmatpush2.msra.mxu0 0.0
    %587 = vmatprep.subr.mxu0 0.0
    %588 = vmatpush2.msra.mxu0 0.0
    %589 = vmatprep.subr.mxu0 0.0
    %590 = vmatpush2.msra.mxu0 0.0
    %591 = vmatprep.subr.mxu0 0.0
    %592 = vmatpush2.msra.mxu0 0.0
    %593 = vmatprep.subr.mxu0 0.0
    %594 = vmatpush2.msra.mxu0 0.0
    %595 = vmatprep.subr.mxu0 0.0
    %596 = vmatpush2.msra.mxu0 0.0
    %597 = vmatprep.subr.mxu0 0.0
    %598 = vmatpush2.msra.mxu0 0.0
    %599 = vmatprep.subr.mxu0 0.0
    %600 = vmatpush2.msra.mxu0 0.0
    %601 = vmatprep.subr.mxu0 0.0
    %602 = vmatpush2.msra.mxu0 0.0
    %603 = vmatprep.subr.mxu0 0.0
    %604 = vmatpush2.msra.mxu0 0.0
    %605 = vmatprep.subr.mxu0 0.0
    %606 = vmatpush2.msra.mxu0 0.0
    %607 = vmatprep.subr.mxu0 0.0
    %608 = vmatpush2.msra.mxu0 0.0
    %609 = vmatprep.subr.mxu0 0.0
    %610 = vmatpush2.msra.mxu0 0.0
    %611 = vmatprep.subr.mxu0 0.0
    %612 = vmatpush2.msra.mxu0 0.0
    %613 = vmatprep.subr.mxu0 0.0
    %614 = vmatpush2.msra.mxu0 0.0
    %615 = vmatprep.subr.mxu0 0.0
    %616 = vmatpush2.msra.mxu0 0.0
    %617 = vmatprep.mubr.f32.mxu0 0.0
    %618 = vmatmul.mubr.f32.gmra.mxu0 %v551
    %v619 = vpop.f32.mrf.mxu0
    %v620 = vadd.f32 %v549, %v619
    %v621 = vpop.f32.mrf.mxu0
    %622 = vdwg.mxu0
    %v623 = vadd.s32 %v330, 4294967232
    %v624 = vlaneseq
    %v625 = vshrl.u32 %v624, 7
    %v626 = vsub.s32 %v623, %v625
    %v627 = vrot.slane %v402, %v626
    %v628 = vlaneseq
    %v629 = vshrl.u32 %v628, 7
    %v630 = vsub.s32 %v623, %v629
    %v631 = vrot.slane %v407, %v630
    %v632 = vsel %vm339, %v631, %v627
    %v634 = vsel %vm123, %v620, %v540
    %v635 = vsel %vm436, %v634, %v632
    %vm636 = vcmask 588800
    %v637 = vsel %vm636, %v635, 0.0
    %638 = vst [vmem:[#allocation11] sm:$0x3] %v637
    // Predicated region
    $region42: #{tpu_custom_call.1} parent=1 // pred_check
      _
    $region43: #{tpu_custom_call.1} parent=1 // pred_check_branch
      %640 = sbr.rel (0) target = $region45
    $region44: #{tpu_custom_call.1} parent=1 // pred_region
      %s642 = ssub.s32 32, 32
      %643 = vsyncadd [#allocation4], %s642
      %s645 = sshll.u32 [#allocation11], 4
      %s646 = int_to_ptr.vmem [resolvable:$true] %s645
      %648 = dma.vmem_to_hbm [thread:$0]  %s646, 32, %s5, [#allocation4]
    $region45: #{tpu_custom_call.1} parent=1 // pred_fallthru
      _
    // Predicated region
    $region46: #{tpu_custom_call.1} parent=1 // pred_check
      _
    $region47: #{tpu_custom_call.1} parent=1 // pred_check_branch
      %650 = sbr.rel (0) target = $region49
    $region48: #{tpu_custom_call.1} parent=1 // pred_region
      %651 = dma.done [#allocation4], 32
    $region49: #{tpu_custom_call.1} parent=1 // pred_fallthru
      _
    %652 = vsyncpa [#allocation3], 1
    %653 = vsyncpa [#allocation6], 1
    %654 = vsyncpa [#allocation9], 1
    %655 = vsyncpa [#allocation4], 1

</llo_original>
